<compile_context>
chip_gen: v7x
topology: tpu7x:2x2x1
jax: 0.10.0
libtpu: 0.0.40
codegen_flags: <defaults>
</compile_context>

<pallas_src>
import functools

import jax
import jax.numpy as jnp
import numpy as np
from jax.experimental import pallas as pl
from jax.experimental.pallas import tpu as pltpu


def _stochastic_forward_kernel(sidx_ref, mask_ref,                       # scalar prefetch (SMEM)
                               x_ref, theta_ref, chains_ref, pmap_ref,   # VMEM inputs
                               bias_ref, y_ref, w_scratch,               # VMEM out + scratch
                               *, tb, num_groups):
    """One grid step composes `tb` VI weight samples and runs one MXU matmul."""
    step = pl.program_id(0)
    pmap = pmap_ref[...]          # (D_in, D_out) int32, resident across the grid
    theta = theta_ref[...]        # (D_in, D_out) f32,  resident across the grid
    d_out = theta.shape[-1]

    for t in range(tb):                              # static unroll, tb is small
        b = step * tb + t                            # global VI sample index
        w = theta                                    # mask==1 groups keep theta_actual
        for g in range(num_groups):                  # static unroll, G is small
            m = mask_ref[g, b]                       # SMEM scalar, 0 or 1
            c_idx = sidx_ref[g, b]                   # SMEM scalar chain index
            # group id becomes unmatched (-1) when the mask keeps theta_actual
            g_eff = jnp.where(m == 0, g, -1)
            w = jnp.where(pmap == g_eff, chains_ref[c_idx], w)
        # pack this sample's weights into its lane slab of the scratch
        w_scratch[:, t * d_out:(t + 1) * d_out] = w

    # One lane-dense matmul for all tb samples: (N, D_in) @ (D_in, tb*D_out)
    y = jnp.dot(x_ref[...], w_scratch[...], preferred_element_type=jnp.float32)
    y_ref[0] = (y + bias_ref[...]).astype(y_ref.dtype)


def _pick_samples_per_step(batch, d_out, target_lanes=128):
    """Largest divisor of `batch` with tb*D_out close to (>=) 128 lanes."""
    want = max(1, -(-target_lanes // d_out))         # ceil(target / D_out)
    tb = 1
    for t in range(1, batch + 1):
        if batch % t == 0 and t <= want:
            tb = t
    return tb


def stochastic_network_forward(x, theta_actual, theta_chains, parameter_map,
                               sample_idx_t, mask_t, bias, *, samples_per_step=None):
    """
    x            : (N, D_in)           f32
    theta_actual : (D_in, D_out)       f32
    theta_chains : (C, D_in, D_out)    f32
    parameter_map: (D_in, D_out)       int32, values in [0, G)
    sample_idx_t : (G, B)              int32   (parameter_group_sample_idx.t())
    mask_t       : (G, B)              binary  (parameter_group_mask.t())
    bias         : (1, D_out)          f32
    returns Y    : (B, N, D_out)       f32
    """
    N, D_in = x.shape
    C, _, D_out = theta_chains.shape
    G, B = sample_idx_t.shape

    tb = samples_per_step if samples_per_step is not None else _pick_samples_per_step(B, D_out)
    assert B % tb == 0, "samples_per_step must divide the VI batch size"
    num_steps = B // tb

    # Tiny per-group tables -> SMEM scalar prefetch (module masks are binary {0,1}).
    sidx_smem = sample_idx_t.astype(jnp.int32)                 # (G, B)
    mask_smem = mask_t.astype(jnp.int32)                       # (G, B)
    pmap = parameter_map.astype(jnp.int32)                     # (D_in, D_out)
    bias_tiled = jnp.tile(bias.astype(jnp.float32), (1, tb))   # (1, tb*D_out)

    kernel = functools.partial(_stochastic_forward_kernel, tb=tb, num_groups=G)

    flops = 2 * B * N * D_in * D_out
    bytes_accessed = 4 * (C * D_in * D_out + N * D_in + 2 * D_in * D_out
                          + B * N * D_out + 2 * G * B + tb * D_out)
    vmem_est = 2 * 4 * (C * D_in * D_out + N * D_in + 2 * D_in * D_out
                        + tb * D_out + 2 * N * tb * D_out) + (2 << 20)
    vmem_limit = int(min(max(vmem_est, 32 * 1024 * 1024), 48 * 1024 * 1024))

    out = pl.pallas_call(
        kernel,
        out_shape=jax.ShapeDtypeStruct((num_steps, N, tb * D_out), jnp.float32),
        grid_spec=pltpu.PrefetchScalarGridSpec(
            num_scalar_prefetch=2,
            grid=(num_steps,),
            in_specs=[
                pl.BlockSpec((N, D_in), lambda i, *_: (0, 0)),             # X (resident)
                pl.BlockSpec((D_in, D_out), lambda i, *_: (0, 0)),         # theta_actual
                pl.BlockSpec((C, D_in, D_out), lambda i, *_: (0, 0, 0)),   # theta_chains
                pl.BlockSpec((D_in, D_out), lambda i, *_: (0, 0)),         # parameter_map
                pl.BlockSpec((1, tb * D_out), lambda i, *_: (0, 0)),       # bias (tiled)
            ],
            out_specs=pl.BlockSpec((1, N, tb * D_out), lambda i, *_: (i, 0, 0)),
            scratch_shapes=[pltpu.VMEM((D_in, tb * D_out), jnp.float32)],  # packed W
        ),
        compiler_params=pltpu.CompilerParams(
            dimension_semantics=("parallel",),        # disjoint output tiles per step
            vmem_limit_bytes=vmem_limit),
        cost_estimate=pl.CostEstimate(flops=flops, transcendentals=0,
                                      bytes_accessed=bytes_accessed),
    )(sidx_smem, mask_smem, x, theta_actual, theta_chains, pmap, bias_tiled)

    # Un-pack the lane-stacked samples: (num_steps, N, tb*D_out) -> (B, N, D_out).
    out = out.reshape(num_steps, N, tb, D_out)
    out = jnp.transpose(out, (0, 2, 1, 3)).reshape(B, N, D_out)
    return out


def _reference_forward(x, theta_actual, theta_chains, parameter_map,
                       sample_idx_t, mask_t, bias):
    """Pure-JAX reference reproducing StochasticTensor.sample + linear forward."""
    elem_idx = jnp.transpose(sample_idx_t[parameter_map], (2, 0, 1)).astype(jnp.int32)
    elem_mask = jnp.transpose(mask_t[parameter_map], (2, 0, 1)).astype(jnp.float32)

    def one_sample(idx_b, mask_b):
        theta_samples = jnp.take_along_axis(theta_chains, idx_b[None, :, :], axis=0)[0]
        w = (1.0 - mask_b) * theta_samples + mask_b * theta_actual
        return x @ w + bias

    return jax.vmap(one_sample)(elem_idx, elem_mask)


if __name__ == "__main__":
    # Small deterministic configuration consistent with the module:
    #   StochasticTensor("W", (D_in, D_out)), DeterministicTensor("b", (1, D_out)),
    #   num_total_param_groups = G, chain_length = C, dropout_prob = 0.5 (bernoulli),
    #   vi_batch_size = B (sample_weights(batch_size=B, for_training=True)).
    N, D_in, D_out = 8, 32, 32
    G = 4                          # num_total_param_groups
    C = 8                          # chain_length
    B = 8                          # vi_batch_size

    key = jax.random.PRNGKey(0)
    k_x, k_th, k_ch, k_pm, k_idx, k_mask, k_b = jax.random.split(key, 7)

    x = jax.random.normal(k_x, (N, D_in), dtype=jnp.float32)
    theta_actual = jax.random.normal(k_th, (D_in, D_out), dtype=jnp.float32) * 0.001
    theta_chains = jax.random.normal(k_ch, (C, D_in, D_out), dtype=jnp.float32) * 0.001
    parameter_map = jax.random.randint(k_pm, (D_in, D_out), 0, G, dtype=jnp.int32)
    sample_idx_t = jax.random.randint(k_idx, (G, B), 0, C, dtype=jnp.int32)
    mask_t = jax.random.bernoulli(k_mask, 0.5, (G, B)).astype(jnp.float32)
    bias = jax.random.normal(k_b, (1, D_out), dtype=jnp.float32) * 0.001

    y = stochastic_network_forward(x, theta_actual, theta_chains, parameter_map,
                                   sample_idx_t, mask_t, bias)
    y = jax.block_until_ready(y)

    y_ref = _reference_forward(x, theta_actual, theta_chains, parameter_map,
                               sample_idx_t, mask_t, bias)
    np.testing.assert_allclose(np.asarray(y), np.asarray(y_ref), rtol=1e-5, atol=1e-5)

    print("KERNEL_OK")
</pallas_src>

<mosaic_0001>
module attributes {stable_mosaic.version = 11 : i64} {
  func.func @_stochastic_forward_kernel(%arg0: i32, %arg1: memref<4x8xi32, #tpu.memory_space<smem>>, %arg2: memref<4x8xi32, #tpu.memory_space<smem>>, %arg3: memref<8x32xf32, #tpu.memory_space<vmem>>, %arg4: memref<32x32xf32, #tpu.memory_space<vmem>>, %arg5: memref<8x32x32xf32, #tpu.memory_space<vmem>>, %arg6: memref<32x32xi32, #tpu.memory_space<vmem>>, %arg7: memref<1x128xf32, #tpu.memory_space<vmem>>, %arg8: memref<1x8x128xf32, #tpu.memory_space<vmem>>, %arg9: memref<32x128xf32, #tpu.memory_space<vmem>>) attributes {dimension_semantics = [#tpu.dimension_semantics<parallel>], iteration_bounds = array<i64: 2>, scalar_prefetch = 2 : i64, scratch_operands = 1 : i64, tpu.core_type = #tpu.core_type<tc>, window_params = [{pipeline_mode = #tpu.pipeline_mode<synchronous>, transform_indices = @transform_0, window_bounds = array<i64: 8, 32>}, {pipeline_mode = #tpu.pipeline_mode<synchronous>, transform_indices = @transform_1, window_bounds = array<i64: 32, 32>}, {pipeline_mode = #tpu.pipeline_mode<synchronous>, transform_indices = @transform_2, window_bounds = array<i64: 8, 32, 32>}, {pipeline_mode = #tpu.pipeline_mode<synchronous>, transform_indices = @transform_3, window_bounds = array<i64: 32, 32>}, {pipeline_mode = #tpu.pipeline_mode<synchronous>, transform_indices = @transform_4, window_bounds = array<i64: 1, 128>}, {transform_indices = @transform_5, window_bounds = array<i64: 1, 8, 128>}]} {
    %c0 = arith.constant 0 : index
    %c0_0 = arith.constant 0 : index
    %0 = vector.load %arg6[%c0, %c0_0] : memref<32x32xi32, #tpu.memory_space<vmem>>, vector<32x32xi32>
    %c0_1 = arith.constant 0 : index
    %c0_2 = arith.constant 0 : index
    %1 = vector.load %arg4[%c0_1, %c0_2] : memref<32x32xf32, #tpu.memory_space<vmem>>, vector<32x32xf32>
    %c4_i32 = arith.constant 4 : i32
    %2 = arith.muli %arg0, %c4_i32 : i32
    %c0_i32 = arith.constant 0 : i32
    %3 = arith.addi %2, %c0_i32 : i32
    %c0_3 = arith.constant 0 : index
    %4 = arith.index_cast %3 : i32 to index
    %5 = memref.load %arg2[%c0_3, %4] : memref<4x8xi32, #tpu.memory_space<smem>>
    %c0_4 = arith.constant 0 : index
    %6 = arith.index_cast %3 : i32 to index
    %7 = memref.load %arg1[%c0_4, %6] : memref<4x8xi32, #tpu.memory_space<smem>>
    %c0_i32_5 = arith.constant 0 : i32
    %8 = arith.cmpi eq, %5, %c0_i32_5 : i32
    %c0_i32_6 = arith.constant 0 : i32
    %c-1_i32 = arith.constant -1 : i32
    %9 = arith.select %8, %c0_i32_6, %c-1_i32 : i32
    %10 = vector.broadcast %9 : i32 to vector<32x32xi32>
    %11 = arith.cmpi eq, %0, %10 : vector<32x32xi32>
    %12 = arith.index_cast %7 : i32 to index
    %c0_7 = arith.constant 0 : index
    %c0_8 = arith.constant 0 : index
    %13 = vector.load %arg5[%12, %c0_7, %c0_8] : memref<8x32x32xf32, #tpu.memory_space<vmem>>, vector<1x32x32xf32>
    %14 = vector.shape_cast %13 : vector<1x32x32xf32> to vector<32x32xf32>
    %15 = arith.select %11, %14, %1 : vector<32x32xi1>, vector<32x32xf32>
    %c1 = arith.constant 1 : index
    %16 = arith.index_cast %3 : i32 to index
    %17 = memref.load %arg2[%c1, %16] : memref<4x8xi32, #tpu.memory_space<smem>>
    %c1_9 = arith.constant 1 : index
    %18 = arith.index_cast %3 : i32 to index
    %19 = memref.load %arg1[%c1_9, %18] : memref<4x8xi32, #tpu.memory_space<smem>>
    %c0_i32_10 = arith.constant 0 : i32
    %20 = arith.cmpi eq, %17, %c0_i32_10 : i32
    %c1_i32 = arith.constant 1 : i32
    %c-1_i32_11 = arith.constant -1 : i32
    %21 = arith.select %20, %c1_i32, %c-1_i32_11 : i32
    %22 = vector.broadcast %21 : i32 to vector<32x32xi32>
    %23 = arith.cmpi eq, %0, %22 : vector<32x32xi32>
    %24 = arith.index_cast %19 : i32 to index
    %c0_12 = arith.constant 0 : index
    %c0_13 = arith.constant 0 : index
    %25 = vector.load %arg5[%24, %c0_12, %c0_13] : memref<8x32x32xf32, #tpu.memory_space<vmem>>, vector<1x32x32xf32>
    %26 = vector.shape_cast %25 : vector<1x32x32xf32> to vector<32x32xf32>
    %27 = arith.select %23, %26, %15 : vector<32x32xi1>, vector<32x32xf32>
    %c2 = arith.constant 2 : index
    %28 = arith.index_cast %3 : i32 to index
    %29 = memref.load %arg2[%c2, %28] : memref<4x8xi32, #tpu.memory_space<smem>>
    %c2_14 = arith.constant 2 : index
    %30 = arith.index_cast %3 : i32 to index
    %31 = memref.load %arg1[%c2_14, %30] : memref<4x8xi32, #tpu.memory_space<smem>>
    %c0_i32_15 = arith.constant 0 : i32
    %32 = arith.cmpi eq, %29, %c0_i32_15 : i32
    %c2_i32 = arith.constant 2 : i32
    %c-1_i32_16 = arith.constant -1 : i32
    %33 = arith.select %32, %c2_i32, %c-1_i32_16 : i32
    %34 = vector.broadcast %33 : i32 to vector<32x32xi32>
    %35 = arith.cmpi eq, %0, %34 : vector<32x32xi32>
    %36 = arith.index_cast %31 : i32 to index
    %c0_17 = arith.constant 0 : index
    %c0_18 = arith.constant 0 : index
    %37 = vector.load %arg5[%36, %c0_17, %c0_18] : memref<8x32x32xf32, #tpu.memory_space<vmem>>, vector<1x32x32xf32>
    %38 = vector.shape_cast %37 : vector<1x32x32xf32> to vector<32x32xf32>
    %39 = arith.select %35, %38, %27 : vector<32x32xi1>, vector<32x32xf32>
    %c3 = arith.constant 3 : index
    %40 = arith.index_cast %3 : i32 to index
    %41 = memref.load %arg2[%c3, %40] : memref<4x8xi32, #tpu.memory_space<smem>>
    %c3_19 = arith.constant 3 : index
    %42 = arith.index_cast %3 : i32 to index
    %43 = memref.load %arg1[%c3_19, %42] : memref<4x8xi32, #tpu.memory_space<smem>>
    %c0_i32_20 = arith.constant 0 : i32
    %44 = arith.cmpi eq, %41, %c0_i32_20 : i32
    %c3_i32 = arith.constant 3 : i32
    %c-1_i32_21 = arith.constant -1 : i32
    %45 = arith.select %44, %c3_i32, %c-1_i32_21 : i32
    %46 = vector.broadcast %45 : i32 to vector<32x32xi32>
    %47 = arith.cmpi eq, %0, %46 : vector<32x32xi32>
    %48 = arith.index_cast %43 : i32 to index
    %c0_22 = arith.constant 0 : index
    %c0_23 = arith.constant 0 : index
    %49 = vector.load %arg5[%48, %c0_22, %c0_23] : memref<8x32x32xf32, #tpu.memory_space<vmem>>, vector<1x32x32xf32>
    %50 = vector.shape_cast %49 : vector<1x32x32xf32> to vector<32x32xf32>
    %51 = arith.select %47, %50, %39 : vector<32x32xi1>, vector<32x32xf32>
    %c0_24 = arith.constant 0 : index
    %c0_25 = arith.constant 0 : index
    %52 = vector.load %arg9[%c0_24, %c0_25] : memref<32x128xf32, #tpu.memory_space<vmem>>, vector<32x32xf32>
    tpu.vector_store %arg9[%c0_24, %c0_25], %51 {strides = array<i32>} : memref<32x128xf32, #tpu.memory_space<vmem>>, vector<32x32xf32>,
    %c4_i32_26 = arith.constant 4 : i32
    %53 = arith.muli %arg0, %c4_i32_26 : i32
    %c1_i32_27 = arith.constant 1 : i32
    %54 = arith.addi %53, %c1_i32_27 : i32
    %c0_28 = arith.constant 0 : index
    %55 = arith.index_cast %54 : i32 to index
    %56 = memref.load %arg2[%c0_28, %55] : memref<4x8xi32, #tpu.memory_space<smem>>
    %c0_29 = arith.constant 0 : index
    %57 = arith.index_cast %54 : i32 to index
    %58 = memref.load %arg1[%c0_29, %57] : memref<4x8xi32, #tpu.memory_space<smem>>
    %c0_i32_30 = arith.constant 0 : i32
    %59 = arith.cmpi eq, %56, %c0_i32_30 : i32
    %c0_i32_31 = arith.constant 0 : i32
    %c-1_i32_32 = arith.constant -1 : i32
    %60 = arith.select %59, %c0_i32_31, %c-1_i32_32 : i32
    %61 = vector.broadcast %60 : i32 to vector<32x32xi32>
    %62 = arith.cmpi eq, %0, %61 : vector<32x32xi32>
    %63 = arith.index_cast %58 : i32 to index
    %c0_33 = arith.constant 0 : index
    %c0_34 = arith.constant 0 : index
    %64 = vector.load %arg5[%63, %c0_33, %c0_34] : memref<8x32x32xf32, #tpu.memory_space<vmem>>, vector<1x32x32xf32>
    %65 = vector.shape_cast %64 : vector<1x32x32xf32> to vector<32x32xf32>
    %66 = arith.select %62, %65, %1 : vector<32x32xi1>, vector<32x32xf32>
    %c1_35 = arith.constant 1 : index
    %67 = arith.index_cast %54 : i32 to index
    %68 = memref.load %arg2[%c1_35, %67] : memref<4x8xi32, #tpu.memory_space<smem>>
    %c1_36 = arith.constant 1 : index
    %69 = arith.index_cast %54 : i32 to index
    %70 = memref.load %arg1[%c1_36, %69] : memref<4x8xi32, #tpu.memory_space<smem>>
    %c0_i32_37 = arith.constant 0 : i32
    %71 = arith.cmpi eq, %68, %c0_i32_37 : i32
    %c1_i32_38 = arith.constant 1 : i32
    %c-1_i32_39 = arith.constant -1 : i32
    %72 = arith.select %71, %c1_i32_38, %c-1_i32_39 : i32
    %73 = vector.broadcast %72 : i32 to vector<32x32xi32>
    %74 = arith.cmpi eq, %0, %73 : vector<32x32xi32>
    %75 = arith.index_cast %70 : i32 to index
    %c0_40 = arith.constant 0 : index
    %c0_41 = arith.constant 0 : index
    %76 = vector.load %arg5[%75, %c0_40, %c0_41] : memref<8x32x32xf32, #tpu.memory_space<vmem>>, vector<1x32x32xf32>
    %77 = vector.shape_cast %76 : vector<1x32x32xf32> to vector<32x32xf32>
    %78 = arith.select %74, %77, %66 : vector<32x32xi1>, vector<32x32xf32>
    %c2_42 = arith.constant 2 : index
    %79 = arith.index_cast %54 : i32 to index
    %80 = memref.load %arg2[%c2_42, %79] : memref<4x8xi32, #tpu.memory_space<smem>>
    %c2_43 = arith.constant 2 : index
    %81 = arith.index_cast %54 : i32 to index
    %82 = memref.load %arg1[%c2_43, %81] : memref<4x8xi32, #tpu.memory_space<smem>>
    %c0_i32_44 = arith.constant 0 : i32
    %83 = arith.cmpi eq, %80, %c0_i32_44 : i32
    %c2_i32_45 = arith.constant 2 : i32
    %c-1_i32_46 = arith.constant -1 : i32
    %84 = arith.select %83, %c2_i32_45, %c-1_i32_46 : i32
    %85 = vector.broadcast %84 : i32 to vector<32x32xi32>
    %86 = arith.cmpi eq, %0, %85 : vector<32x32xi32>
    %87 = arith.index_cast %82 : i32 to index
    %c0_47 = arith.constant 0 : index
    %c0_48 = arith.constant 0 : index
    %88 = vector.load %arg5[%87, %c0_47, %c0_48] : memref<8x32x32xf32, #tpu.memory_space<vmem>>, vector<1x32x32xf32>
    %89 = vector.shape_cast %88 : vector<1x32x32xf32> to vector<32x32xf32>
    %90 = arith.select %86, %89, %78 : vector<32x32xi1>, vector<32x32xf32>
    %c3_49 = arith.constant 3 : index
    %91 = arith.index_cast %54 : i32 to index
    %92 = memref.load %arg2[%c3_49, %91] : memref<4x8xi32, #tpu.memory_space<smem>>
    %c3_50 = arith.constant 3 : index
    %93 = arith.index_cast %54 : i32 to index
    %94 = memref.load %arg1[%c3_50, %93] : memref<4x8xi32, #tpu.memory_space<smem>>
    %c0_i32_51 = arith.constant 0 : i32
    %95 = arith.cmpi eq, %92, %c0_i32_51 : i32
    %c3_i32_52 = arith.constant 3 : i32
    %c-1_i32_53 = arith.constant -1 : i32
    %96 = arith.select %95, %c3_i32_52, %c-1_i32_53 : i32
    %97 = vector.broadcast %96 : i32 to vector<32x32xi32>
    %98 = arith.cmpi eq, %0, %97 : vector<32x32xi32>
    %99 = arith.index_cast %94 : i32 to index
    %c0_54 = arith.constant 0 : index
    %c0_55 = arith.constant 0 : index
    %100 = vector.load %arg5[%99, %c0_54, %c0_55] : memref<8x32x32xf32, #tpu.memory_space<vmem>>, vector<1x32x32xf32>
    %101 = vector.shape_cast %100 : vector<1x32x32xf32> to vector<32x32xf32>
    %102 = arith.select %98, %101, %90 : vector<32x32xi1>, vector<32x32xf32>
    %c0_56 = arith.constant 0 : index
    %c32 = arith.constant 32 : index
    %103 = vector.load %arg9[%c0_56, %c32] : memref<32x128xf32, #tpu.memory_space<vmem>>, vector<32x32xf32>
    tpu.vector_store %arg9[%c0_56, %c32], %102 {strides = array<i32>} : memref<32x128xf32, #tpu.memory_space<vmem>>, vector<32x32xf32>,
    %c4_i32_57 = arith.constant 4 : i32
    %104 = arith.muli %arg0, %c4_i32_57 : i32
    %c2_i32_58 = arith.constant 2 : i32
    %105 = arith.addi %104, %c2_i32_58 : i32
    %c0_59 = arith.constant 0 : index
    %106 = arith.index_cast %105 : i32 to index
    %107 = memref.load %arg2[%c0_59, %106] : memref<4x8xi32, #tpu.memory_space<smem>>
    %c0_60 = arith.constant 0 : index
    %108 = arith.index_cast %105 : i32 to index
    %109 = memref.load %arg1[%c0_60, %108] : memref<4x8xi32, #tpu.memory_space<smem>>
    %c0_i32_61 = arith.constant 0 : i32
    %110 = arith.cmpi eq, %107, %c0_i32_61 : i32
    %c0_i32_62 = arith.constant 0 : i32
    %c-1_i32_63 = arith.constant -1 : i32
    %111 = arith.select %110, %c0_i32_62, %c-1_i32_63 : i32
    %112 = vector.broadcast %111 : i32 to vector<32x32xi32>
    %113 = arith.cmpi eq, %0, %112 : vector<32x32xi32>
    %114 = arith.index_cast %109 : i32 to index
    %c0_64 = arith.constant 0 : index
    %c0_65 = arith.constant 0 : index
    %115 = vector.load %arg5[%114, %c0_64, %c0_65] : memref<8x32x32xf32, #tpu.memory_space<vmem>>, vector<1x32x32xf32>
    %116 = vector.shape_cast %115 : vector<1x32x32xf32> to vector<32x32xf32>
    %117 = arith.select %113, %116, %1 : vector<32x32xi1>, vector<32x32xf32>
    %c1_66 = arith.constant 1 : index
    %118 = arith.index_cast %105 : i32 to index
    %119 = memref.load %arg2[%c1_66, %118] : memref<4x8xi32, #tpu.memory_space<smem>>
    %c1_67 = arith.constant 1 : index
    %120 = arith.index_cast %105 : i32 to index
    %121 = memref.load %arg1[%c1_67, %120] : memref<4x8xi32, #tpu.memory_space<smem>>
    %c0_i32_68 = arith.constant 0 : i32
    %122 = arith.cmpi eq, %119, %c0_i32_68 : i32
    %c1_i32_69 = arith.constant 1 : i32
    %c-1_i32_70 = arith.constant -1 : i32
    %123 = arith.select %122, %c1_i32_69, %c-1_i32_70 : i32
    %124 = vector.broadcast %123 : i32 to vector<32x32xi32>
    %125 = arith.cmpi eq, %0, %124 : vector<32x32xi32>
    %126 = arith.index_cast %121 : i32 to index
    %c0_71 = arith.constant 0 : index
    %c0_72 = arith.constant 0 : index
    %127 = vector.load %arg5[%126, %c0_71, %c0_72] : memref<8x32x32xf32, #tpu.memory_space<vmem>>, vector<1x32x32xf32>
    %128 = vector.shape_cast %127 : vector<1x32x32xf32> to vector<32x32xf32>
    %129 = arith.select %125, %128, %117 : vector<32x32xi1>, vector<32x32xf32>
    %c2_73 = arith.constant 2 : index
    %130 = arith.index_cast %105 : i32 to index
    %131 = memref.load %arg2[%c2_73, %130] : memref<4x8xi32, #tpu.memory_space<smem>>
    %c2_74 = arith.constant 2 : index
    %132 = arith.index_cast %105 : i32 to index
    %133 = memref.load %arg1[%c2_74, %132] : memref<4x8xi32, #tpu.memory_space<smem>>
    %c0_i32_75 = arith.constant 0 : i32
    %134 = arith.cmpi eq, %131, %c0_i32_75 : i32
    %c2_i32_76 = arith.constant 2 : i32
    %c-1_i32_77 = arith.constant -1 : i32
    %135 = arith.select %134, %c2_i32_76, %c-1_i32_77 : i32
    %136 = vector.broadcast %135 : i32 to vector<32x32xi32>
    %137 = arith.cmpi eq, %0, %136 : vector<32x32xi32>
    %138 = arith.index_cast %133 : i32 to index
    %c0_78 = arith.constant 0 : index
    %c0_79 = arith.constant 0 : index
    %139 = vector.load %arg5[%138, %c0_78, %c0_79] : memref<8x32x32xf32, #tpu.memory_space<vmem>>, vector<1x32x32xf32>
    %140 = vector.shape_cast %139 : vector<1x32x32xf32> to vector<32x32xf32>
    %141 = arith.select %137, %140, %129 : vector<32x32xi1>, vector<32x32xf32>
    %c3_80 = arith.constant 3 : index
    %142 = arith.index_cast %105 : i32 to index
    %143 = memref.load %arg2[%c3_80, %142] : memref<4x8xi32, #tpu.memory_space<smem>>
    %c3_81 = arith.constant 3 : index
    %144 = arith.index_cast %105 : i32 to index
    %145 = memref.load %arg1[%c3_81, %144] : memref<4x8xi32, #tpu.memory_space<smem>>
    %c0_i32_82 = arith.constant 0 : i32
    %146 = arith.cmpi eq, %143, %c0_i32_82 : i32
    %c3_i32_83 = arith.constant 3 : i32
    %c-1_i32_84 = arith.constant -1 : i32
    %147 = arith.select %146, %c3_i32_83, %c-1_i32_84 : i32
    %148 = vector.broadcast %147 : i32 to vector<32x32xi32>
    %149 = arith.cmpi eq, %0, %148 : vector<32x32xi32>
    %150 = arith.index_cast %145 : i32 to index
    %c0_85 = arith.constant 0 : index
    %c0_86 = arith.constant 0 : index
    %151 = vector.load %arg5[%150, %c0_85, %c0_86] : memref<8x32x32xf32, #tpu.memory_space<vmem>>, vector<1x32x32xf32>
    %152 = vector.shape_cast %151 : vector<1x32x32xf32> to vector<32x32xf32>
    %153 = arith.select %149, %152, %141 : vector<32x32xi1>, vector<32x32xf32>
    %c0_87 = arith.constant 0 : index
    %c64 = arith.constant 64 : index
    %154 = vector.load %arg9[%c0_87, %c64] : memref<32x128xf32, #tpu.memory_space<vmem>>, vector<32x32xf32>
    tpu.vector_store %arg9[%c0_87, %c64], %153 {strides = array<i32>} : memref<32x128xf32, #tpu.memory_space<vmem>>, vector<32x32xf32>,
    %c4_i32_88 = arith.constant 4 : i32
    %155 = arith.muli %arg0, %c4_i32_88 : i32
    %c3_i32_89 = arith.constant 3 : i32
    %156 = arith.addi %155, %c3_i32_89 : i32
    %c0_90 = arith.constant 0 : index
    %157 = arith.index_cast %156 : i32 to index
    %158 = memref.load %arg2[%c0_90, %157] : memref<4x8xi32, #tpu.memory_space<smem>>
    %c0_91 = arith.constant 0 : index
    %159 = arith.index_cast %156 : i32 to index
    %160 = memref.load %arg1[%c0_91, %159] : memref<4x8xi32, #tpu.memory_space<smem>>
    %c0_i32_92 = arith.constant 0 : i32
    %161 = arith.cmpi eq, %158, %c0_i32_92 : i32
    %c0_i32_93 = arith.constant 0 : i32
    %c-1_i32_94 = arith.constant -1 : i32
    %162 = arith.select %161, %c0_i32_93, %c-1_i32_94 : i32
    %163 = vector.broadcast %162 : i32 to vector<32x32xi32>
    %164 = arith.cmpi eq, %0, %163 : vector<32x32xi32>
    %165 = arith.index_cast %160 : i32 to index
    %c0_95 = arith.constant 0 : index
    %c0_96 = arith.constant 0 : index
    %166 = vector.load %arg5[%165, %c0_95, %c0_96] : memref<8x32x32xf32, #tpu.memory_space<vmem>>, vector<1x32x32xf32>
    %167 = vector.shape_cast %166 : vector<1x32x32xf32> to vector<32x32xf32>
    %168 = arith.select %164, %167, %1 : vector<32x32xi1>, vector<32x32xf32>
    %c1_97 = arith.constant 1 : index
    %169 = arith.index_cast %156 : i32 to index
    %170 = memref.load %arg2[%c1_97, %169] : memref<4x8xi32, #tpu.memory_space<smem>>
    %c1_98 = arith.constant 1 : index
    %171 = arith.index_cast %156 : i32 to index
    %172 = memref.load %arg1[%c1_98, %171] : memref<4x8xi32, #tpu.memory_space<smem>>
    %c0_i32_99 = arith.constant 0 : i32
    %173 = arith.cmpi eq, %170, %c0_i32_99 : i32
    %c1_i32_100 = arith.constant 1 : i32
    %c-1_i32_101 = arith.constant -1 : i32
    %174 = arith.select %173, %c1_i32_100, %c-1_i32_101 : i32
    %175 = vector.broadcast %174 : i32 to vector<32x32xi32>
    %176 = arith.cmpi eq, %0, %175 : vector<32x32xi32>
    %177 = arith.index_cast %172 : i32 to index
    %c0_102 = arith.constant 0 : index
    %c0_103 = arith.constant 0 : index
    %178 = vector.load %arg5[%177, %c0_102, %c0_103] : memref<8x32x32xf32, #tpu.memory_space<vmem>>, vector<1x32x32xf32>
    %179 = vector.shape_cast %178 : vector<1x32x32xf32> to vector<32x32xf32>
    %180 = arith.select %176, %179, %168 : vector<32x32xi1>, vector<32x32xf32>
    %c2_104 = arith.constant 2 : index
    %181 = arith.index_cast %156 : i32 to index
    %182 = memref.load %arg2[%c2_104, %181] : memref<4x8xi32, #tpu.memory_space<smem>>
    %c2_105 = arith.constant 2 : index
    %183 = arith.index_cast %156 : i32 to index
    %184 = memref.load %arg1[%c2_105, %183] : memref<4x8xi32, #tpu.memory_space<smem>>
    %c0_i32_106 = arith.constant 0 : i32
    %185 = arith.cmpi eq, %182, %c0_i32_106 : i32
    %c2_i32_107 = arith.constant 2 : i32
    %c-1_i32_108 = arith.constant -1 : i32
    %186 = arith.select %185, %c2_i32_107, %c-1_i32_108 : i32
    %187 = vector.broadcast %186 : i32 to vector<32x32xi32>
    %188 = arith.cmpi eq, %0, %187 : vector<32x32xi32>
    %189 = arith.index_cast %184 : i32 to index
    %c0_109 = arith.constant 0 : index
    %c0_110 = arith.constant 0 : index
    %190 = vector.load %arg5[%189, %c0_109, %c0_110] : memref<8x32x32xf32, #tpu.memory_space<vmem>>, vector<1x32x32xf32>
    %191 = vector.shape_cast %190 : vector<1x32x32xf32> to vector<32x32xf32>
    %192 = arith.select %188, %191, %180 : vector<32x32xi1>, vector<32x32xf32>
    %c3_111 = arith.constant 3 : index
    %193 = arith.index_cast %156 : i32 to index
    %194 = memref.load %arg2[%c3_111, %193] : memref<4x8xi32, #tpu.memory_space<smem>>
    %c3_112 = arith.constant 3 : index
    %195 = arith.index_cast %156 : i32 to index
    %196 = memref.load %arg1[%c3_112, %195] : memref<4x8xi32, #tpu.memory_space<smem>>
    %c0_i32_113 = arith.constant 0 : i32
    %197 = arith.cmpi eq, %194, %c0_i32_113 : i32
    %c3_i32_114 = arith.constant 3 : i32
    %c-1_i32_115 = arith.constant -1 : i32
    %198 = arith.select %197, %c3_i32_114, %c-1_i32_115 : i32
    %199 = vector.broadcast %198 : i32 to vector<32x32xi32>
    %200 = arith.cmpi eq, %0, %199 : vector<32x32xi32>
    %201 = arith.index_cast %196 : i32 to index
    %c0_116 = arith.constant 0 : index
    %c0_117 = arith.constant 0 : index
    %202 = vector.load %arg5[%201, %c0_116, %c0_117] : memref<8x32x32xf32, #tpu.memory_space<vmem>>, vector<1x32x32xf32>
    %203 = vector.shape_cast %202 : vector<1x32x32xf32> to vector<32x32xf32>
    %204 = arith.select %200, %203, %192 : vector<32x32xi1>, vector<32x32xf32>
    %c0_118 = arith.constant 0 : index
    %c96 = arith.constant 96 : index
    %205 = vector.load %arg9[%c0_118, %c96] : memref<32x128xf32, #tpu.memory_space<vmem>>, vector<32x32xf32>
    tpu.vector_store %arg9[%c0_118, %c96], %204 {strides = array<i32>} : memref<32x128xf32, #tpu.memory_space<vmem>>, vector<32x32xf32>,
    %c0_119 = arith.constant 0 : index
    %c0_120 = arith.constant 0 : index
    %206 = vector.load %arg3[%c0_119, %c0_120] : memref<8x32xf32, #tpu.memory_space<vmem>>, vector<8x32xf32>
    %c0_121 = arith.constant 0 : index
    %c0_122 = arith.constant 0 : index
    %207 = vector.load %arg9[%c0_121, %c0_122] : memref<32x128xf32, #tpu.memory_space<vmem>>, vector<32x128xf32>
    %cst = arith.constant dense<0.000000e+00> : vector<8x128xf32>
    %208 = tpu.matmul %206, %207, %cst {dimension_numbers = #tpu.dot_dimension_numbers<[1], [0], [0], [1], [0, 0, 1, 1], [], []>} : vector<8x32xf32>, vector<32x128xf32>, vector<8x128xf32> -> vector<8x128xf32>
    %c0_123 = arith.constant 0 : index
    %c0_124 = arith.constant 0 : index
    %209 = vector.load %arg7[%c0_123, %c0_124] : memref<1x128xf32, #tpu.memory_space<vmem>>, vector<1x128xf32>
    %210 = vector.broadcast %209 : vector<1x128xf32> to vector<8x128xf32>
    %211 = arith.addf %208, %210 : vector<8x128xf32>
    %c0_125 = arith.constant 0 : index
    %c0_126 = arith.constant 0 : index
    %c0_127 = arith.constant 0 : index
    %212 = vector.load %arg8[%c0_125, %c0_126, %c0_127] : memref<1x8x128xf32, #tpu.memory_space<vmem>>, vector<1x8x128xf32>
    %213 = vector.shape_cast %212 : vector<1x8x128xf32> to vector<8x128xf32>
    %214 = vector.shape_cast %211 : vector<8x128xf32> to vector<1x8x128xf32>
    tpu.vector_store %arg8[%c0_125, %c0_126, %c0_127], %214 {strides = array<i32>} : memref<1x8x128xf32, #tpu.memory_space<vmem>>, vector<1x8x128xf32>,
    return
  }
  func.func @transform_0(%arg0: i32, %arg1: memref<4x8xi32, #tpu.memory_space<smem>>, %arg2: memref<4x8xi32, #tpu.memory_space<smem>>) -> (i32, i32) {
    %c0_i32 = arith.constant 0 : i32
    %c0_i32_0 = arith.constant 0 : i32
    %c0_i32_1 = arith.constant 0 : i32
    return %c0_i32, %c0_i32_0 : i32, i32
  }
  func.func @transform_1(%arg0: i32, %arg1: memref<4x8xi32, #tpu.memory_space<smem>>, %arg2: memref<4x8xi32, #tpu.memory_space<smem>>) -> (i32, i32) {
    %c0_i32 = arith.constant 0 : i32
    %c0_i32_0 = arith.constant 0 : i32
    %c0_i32_1 = arith.constant 0 : i32
    return %c0_i32, %c0_i32_0 : i32, i32
  }
  func.func @transform_2(%arg0: i32, %arg1: memref<4x8xi32, #tpu.memory_space<smem>>, %arg2: memref<4x8xi32, #tpu.memory_space<smem>>) -> (i32, i32, i32) {
    %c0_i32 = arith.constant 0 : i32
    %c0_i32_0 = arith.constant 0 : i32
    %c0_i32_1 = arith.constant 0 : i32
    %c0_i32_2 = arith.constant 0 : i32
    return %c0_i32, %c0_i32_0, %c0_i32_1 : i32, i32, i32
  }
  func.func @transform_3(%arg0: i32, %arg1: memref<4x8xi32, #tpu.memory_space<smem>>, %arg2: memref<4x8xi32, #tpu.memory_space<smem>>) -> (i32, i32) {
    %c0_i32 = arith.constant 0 : i32
    %c0_i32_0 = arith.constant 0 : i32
    %c0_i32_1 = arith.constant 0 : i32
    return %c0_i32, %c0_i32_0 : i32, i32
  }
  func.func @transform_4(%arg0: i32, %arg1: memref<4x8xi32, #tpu.memory_space<smem>>, %arg2: memref<4x8xi32, #tpu.memory_space<smem>>) -> (i32, i32) {
    %c0_i32 = arith.constant 0 : i32
    %c0_i32_0 = arith.constant 0 : i32
    %c0_i32_1 = arith.constant 0 : i32
    return %c0_i32, %c0_i32_0 : i32, i32
  }
  func.func @transform_5(%arg0: i32, %arg1: memref<4x8xi32, #tpu.memory_space<smem>>, %arg2: memref<4x8xi32, #tpu.memory_space<smem>>) -> (i32, i32, i32) {
    %c0_i32 = arith.constant 0 : i32
    %c0_i32_0 = arith.constant 0 : i32
    %c0_i32_1 = arith.constant 0 : i32
    return %arg0, %c0_i32, %c0_i32_0 : i32, i32, i32
  }
}

</mosaic_0001>

<llo_original>
// kernel: tpu_custom_call.1
$region0: #{tpu_custom_call.1}
  #allocation0 [shape = 'u32[]', space=smem, size = 0x4, offset = 0x4, fixed_abs, tag = 'smem constant byte address 0x4 - core index']
  #allocation1 [shape = 'u32[144,128]{1,0:T(1,128)}', space=vmem, size = 0x12000, scoped, tag = 'internal scratch']
  #allocation2 [shape = 'f32[32,128]{1,0:T(8,128)}', space=vmem, size = 0x4000, scoped, tag = 'scratch operand']
  #allocation3 [shape = 's32[1]{0}', space=sflag, size = 0x4, scoped, tag = 'scoped memory for tpu_custom_call.1']
  #allocation4 [shape = 'u8[2048]{0}', space=smem, size = 0x800, scoped, tag = 'prefetched SMEM operand 0']
  #allocation5 [shape = 'u8[2048]{0}', space=smem, size = 0x800, scoped, tag = 'prefetched SMEM operand 1']
  %s0 = inlined_call_operand.hbm [shape: s32[4,8], index: 0, kind: input, shape index: {}]
  %s1 = inlined_call_operand.hbm [shape: s32[4,8], index: 1, kind: input, shape index: {}]
  %s2 = inlined_call_operand.hbm [shape: f32[8,32], index: 2, kind: input, shape index: {}]
  %s3 = inlined_call_operand.hbm [shape: f32[32,32], index: 3, kind: input, shape index: {}]
  %s4 = inlined_call_operand.hbm [shape: f32[8,32,32], index: 4, kind: input, shape index: {}]
  %s5 = inlined_call_operand.hbm [shape: s32[32,32], index: 5, kind: input, shape index: {}]
  %s6 = inlined_call_operand.vmem [shape: f32[1,128], index: 6, kind: input, shape index: {}]
  %s7 = inlined_call_operand.hbm [shape: f32[2,8,128], index: 7, kind: output, shape index: {}]
  %s8 = sld [smem:[#allocation0]]
  $region69: #{tpu_custom_call.1} parent=0
    _
  %s10 = ssub.s32 1, %s8
  %s11 = scalar_select 0, %s10, %s8
  %13 = dma.hbm_to_smem %s0, 64, [#allocation4], [#allocation3]
  %15 = dma.hbm_to_smem %s1, 64, [#allocation5], [#allocation3]
  %16 = dma.done [#allocation3], 128
  %17 = sfence
  $region1: #{tpu_custom_call.1} parent=0
    #allocation6 [shape = 'u8[4096]{0}', space=vmem, size = 0x1000, scoped, tag = 'input window, operand 2, single buffered']
    #allocation7 [shape = 's32[2]{0}', space=sflag, size = 0x8, scoped, tag = 'scoped memory for tpu_custom_call.1']
    #allocation8 [shape = 's32[2]{0}', space=sflag, size = 0x8, scoped, tag = 'scoped memory for tpu_custom_call.1']
    #allocation9 [shape = 'u8[16384]{0}', space=vmem, size = 0x4000, scoped, tag = 'input window, operand 3, single buffered']
    #allocation10 [shape = 's32[1]{0}', space=sflag, size = 0x4, scoped, tag = 'scoped memory for tpu_custom_call.1']
    #allocation11 [shape = 'u8[131072]{0}', space=vmem, size = 0x20000, scoped, tag = 'input window, operand 4, single buffered']
    #allocation12 [shape = 'u8[16384]{0}', space=vmem, size = 0x4000, scoped, tag = 'input window, operand 5, single buffered']
    #allocation13 [shape = 's32[1]{0}', space=sflag, size = 0x4, scoped, tag = 'scoped memory for tpu_custom_call.1']
    #allocation14 [shape = 'u8[8192]{0}', space=vmem, size = 0x2000, scoped, tag = 'output window, operand 0']
    %18 = vsyncpa [#allocation7], 0
    %19 = vsyncpa [#allocation10], 0
    %20 = vsyncpa [#allocation13], 0
    %21 = vsyncpa [#allocation8], 0
    %s22 = scalar_lea.sflag [#allocation8], 1
    %23 = vsyncpa %s22, 0
    loop: start=0, step=1, limit=4
    $region2: #{tpu_custom_call.1} parent=1 // loop_pre_header
      _
    $region3: #{tpu_custom_call.1} parent=1 // loop_header
      %s25 = sphi 0, %s29
      %p26 = scmp.ge.s32.totalorder %s25, 4
      %s33 = sphi 0, %s33
      %s35 = sphi 0, %s33
      %s36 = sphi 0, %s35
      %s50 = sphi 0, %s36
      %s54 = sphi 0, %s54
      %s56 = sphi 0, %s54
      %s57 = sphi 0, %s56
      %s71 = sphi 0, %s57
      %s75 = sphi 0, %s75
      %s77 = sphi 0, %s75
      %s78 = sphi 0, %s77
      %s92 = sphi 0, %s78
      %s96 = sphi 0, %s96
      %s98 = sphi 0, %s96
      %s99 = sphi 0, %s98
      %s113 = sphi 0, %s99
      %s117 = sphi 0, %s117
      %s119 = sphi 0, %s117
      %s120 = sphi 0, %s119
      %s134 = sphi 0, %s120
      %s140 = sphi 0, %s142
      %s143 = sphi 0, %s140
      %s144 = sphi 0, %s143
      %s160 = sphi 0, %s144
    $region4: #{tpu_custom_call.1} parent=1 // loop_header_branch
      %28 = sbr.rel (%p26) target = $region8
    $region5: #{tpu_custom_call.1} parent=1 // loop_body
      %s30 = ssub.s32 %s25, 1
      %s31 = ssub.s32 %s25, 2
      %s32 = sadd.s32 %s25, 1
      %s34 = sadd.s32 %s33, 1
      %p37 = scmp.eq.s32.totalorder %s25, 1
      %p38 = scmp.ne.s32.totalorder %s33, %s35
      %p39 = scmp.eq.s32.totalorder %s25, 0
      %p40 = por %p38, %p39
      %p41 = scmp.ne.s32.totalorder %s33, %s35
      %p42 = scmp.eq.s32.totalorder %s30, 1
      %p43 = por %p41, %p42
      %p44 = scmp.ne.s32.totalorder %s35, %s36
      %p45 = scmp.eq.s32.totalorder %s30, 0
      %p46 = por %p44, %p45
      %p47 = scmp.ne.s32.totalorder %s35, %s36
      %p48 = scmp.eq.s32.totalorder %s31, 1
      %p49 = por %p47, %p48
      %p51 = scmp.ne.s32.totalorder %s36, %s50
      %p52 = scmp.eq.s32.totalorder %s31, 0
      %p53 = por %p51, %p52
      %s55 = sadd.s32 %s54, 1
      %p58 = scmp.eq.s32.totalorder %s25, 1
      %p59 = scmp.ne.s32.totalorder %s54, %s56
      %p60 = scmp.eq.s32.totalorder %s25, 0
      %p61 = por %p59, %p60
      %p62 = scmp.ne.s32.totalorder %s54, %s56
      %p63 = scmp.eq.s32.totalorder %s30, 1
      %p64 = por %p62, %p63
      %p65 = scmp.ne.s32.totalorder %s56, %s57
      %p66 = scmp.eq.s32.totalorder %s30, 0
      %p67 = por %p65, %p66
      %p68 = scmp.ne.s32.totalorder %s56, %s57
      %p69 = scmp.eq.s32.totalorder %s31, 1
      %p70 = por %p68, %p69
      %p72 = scmp.ne.s32.totalorder %s57, %s71
      %p73 = scmp.eq.s32.totalorder %s31, 0
      %p74 = por %p72, %p73
      %s76 = sadd.s32 %s75, 1
      %p79 = scmp.eq.s32.totalorder %s25, 1
      %p80 = scmp.ne.s32.totalorder %s75, %s77
      %p81 = scmp.eq.s32.totalorder %s25, 0
      %p82 = por %p80, %p81
      %p83 = scmp.ne.s32.totalorder %s75, %s77
      %p84 = scmp.eq.s32.totalorder %s30, 1
      %p85 = por %p83, %p84
      %p86 = scmp.ne.s32.totalorder %s77, %s78
      %p87 = scmp.eq.s32.totalorder %s30, 0
      %p88 = por %p86, %p87
      %p89 = scmp.ne.s32.totalorder %s77, %s78
      %p90 = scmp.eq.s32.totalorder %s31, 1
      %p91 = por %p89, %p90
      %p93 = scmp.ne.s32.totalorder %s78, %s92
      %p94 = scmp.eq.s32.totalorder %s31, 0
      %p95 = por %p93, %p94
      %s97 = sadd.s32 %s96, 1
      %p100 = scmp.eq.s32.totalorder %s25, 1
      %p101 = scmp.ne.s32.totalorder %s96, %s98
      %p102 = scmp.eq.s32.totalorder %s25, 0
      %p103 = por %p101, %p102
      %p104 = scmp.ne.s32.totalorder %s96, %s98
      %p105 = scmp.eq.s32.totalorder %s30, 1
      %p106 = por %p104, %p105
      %p107 = scmp.ne.s32.totalorder %s98, %s99
      %p108 = scmp.eq.s32.totalorder %s30, 0
      %p109 = por %p107, %p108
      %p110 = scmp.ne.s32.totalorder %s98, %s99
      %p111 = scmp.eq.s32.totalorder %s31, 1
      %p112 = por %p110, %p111
      %p114 = scmp.ne.s32.totalorder %s99, %s113
      %p115 = scmp.eq.s32.totalorder %s31, 0
      %p116 = por %p114, %p115
      %s118 = sadd.s32 %s117, 1
      %p121 = scmp.eq.s32.totalorder %s25, 1
      %p122 = scmp.ne.s32.totalorder %s117, %s119
      %p123 = scmp.eq.s32.totalorder %s25, 0
      %p124 = por %p122, %p123
      %p125 = scmp.ne.s32.totalorder %s117, %s119
      %p126 = scmp.eq.s32.totalorder %s30, 1
      %p127 = por %p125, %p126
      %p128 = scmp.ne.s32.totalorder %s119, %s120
      %p129 = scmp.eq.s32.totalorder %s30, 0
      %p130 = por %p128, %p129
      %p131 = scmp.ne.s32.totalorder %s119, %s120
      %p132 = scmp.eq.s32.totalorder %s31, 1
      %p133 = por %p131, %p132
      %p135 = scmp.ne.s32.totalorder %s120, %s134
      %p136 = scmp.eq.s32.totalorder %s31, 0
      %p137 = por %p135, %p136
      %s138 = ssub.s32 %s25, %s32
      %p139 = scmp.eq.s32.totalorder %s138, 0
      %s141 = sadd.s32 %s140, 1
      %s142 = scalar_select %p139, %s140, %s141
      %p145 = pneg %p139
      %p146 = scmp.eq.s32.totalorder %s25, 1
      %p147 = por %p145, %p146
      %p148 = scmp.ne.s32.totalorder %s140, %s143
      %p149 = scmp.eq.s32.totalorder %s25, 0
      %p150 = por %p148, %p149
      %p151 = scmp.ne.s32.totalorder %s140, %s143
      %p152 = scmp.eq.s32.totalorder %s30, 1
      %p153 = por %p151, %p152
      %p154 = scmp.ne.s32.totalorder %s143, %s144
      %p155 = scmp.eq.s32.totalorder %s30, 0
      %p156 = por %p154, %p155
      %p157 = scmp.ne.s32.totalorder %s143, %s144
      %p158 = scmp.eq.s32.totalorder %s31, 1
      %p159 = por %p157, %p158
      %p161 = scmp.ne.s32.totalorder %s144, %s160
      %p162 = scmp.eq.s32.totalorder %s31, 0
      %p163 = por %p161, %p162
      %p164 = scmp.le.s32.totalorder 1, %s25
      %p165 = scmp.lt.s32.totalorder %s25, 3
      %p166 = pnand %p164, %p165
      %p167 = pneg %p166
      // Predicated region
      $region9: #{tpu_custom_call.1} parent=5 // pred_check
        _
      $region10: #{tpu_custom_call.1} parent=5 // pred_check_branch
        %169 = sbr.rel (%p166) target = $region12
      $region11: #{tpu_custom_call.1} parent=5 // pred_region
        %s170 = ssub.s32 %s25, 1
        // Predicated region
        $region13: #{tpu_custom_call.1} parent=11 // pred_check
          %p171 = pneg %p46
        $region14: #{tpu_custom_call.1} parent=11 // pred_check_branch
          %173 = sbr.rel (%p171) target = $region16
        $region15: #{tpu_custom_call.1} parent=11 // pred_region
          %s175 = ssub.s32 128, 128
          %176 = vsyncadd [#allocation7], %s175
          %s178 = sshll.u32 [#allocation6], 4
          %s179 = int_to_ptr.vmem [resolvable:$true] %s178
          %181 = dma.hbm_to_vmem [thread:$0]  %s2, 128, %s179, [#allocation7]
        $region16: #{tpu_custom_call.1} parent=11 // pred_fallthru
          _
        // Predicated region
        $region17: #{tpu_custom_call.1} parent=11 // pred_check
          %p182 = pneg %p67
        $region18: #{tpu_custom_call.1} parent=11 // pred_check_branch
          %184 = sbr.rel (%p182) target = $region20
        $region19: #{tpu_custom_call.1} parent=11 // pred_region
          %s186 = ssub.s32 512, 512
          %187 = vsyncadd [#allocation10], %s186
          %s188 = sshll.u32 [#allocation9], 4
          %s189 = int_to_ptr.vmem [resolvable:$true] %s188
          %194 = dma.hbm_to_vmem [thread:$0]  %s3, 512, %s189, [#allocation10], 128, 128, 8
        $region20: #{tpu_custom_call.1} parent=11 // pred_fallthru
          _
        // Predicated region
        $region21: #{tpu_custom_call.1} parent=11 // pred_check
          %p195 = pneg %p88
        $region22: #{tpu_custom_call.1} parent=11 // pred_check_branch
          %197 = sbr.rel (%p195) target = $region24
        $region23: #{tpu_custom_call.1} parent=11 // pred_region
          %s199 = ssub.s32 4096, 4096
          %200 = vsyncadd [#allocation10], %s199
          %s201 = sshll.u32 [#allocation11], 4
          %s202 = int_to_ptr.vmem [resolvable:$true] %s201
          %207 = dma.hbm_to_vmem [thread:$0]  %s4, 4096, %s202, [#allocation10], 128, 128, 8
        $region24: #{tpu_custom_call.1} parent=11 // pred_fallthru
          _
        // Predicated region
        $region25: #{tpu_custom_call.1} parent=11 // pred_check
          %p208 = pneg %p109
        $region26: #{tpu_custom_call.1} parent=11 // pred_check_branch
          %210 = sbr.rel (%p208) target = $region28
        $region27: #{tpu_custom_call.1} parent=11 // pred_region
          %s212 = ssub.s32 512, 512
          %213 = vsyncadd [#allocation13], %s212
          %s214 = sshll.u32 [#allocation12], 4
          %s215 = int_to_ptr.vmem [resolvable:$true] %s214
          %220 = dma.hbm_to_vmem [thread:$0]  %s5, 512, %s215, [#allocation13], 128, 128, 8
        $region28: #{tpu_custom_call.1} parent=11 // pred_fallthru
          _
        // Predicated region
        $region29: #{tpu_custom_call.1} parent=11 // pred_check
          %p221 = pneg %p130
        $region30: #{tpu_custom_call.1} parent=11 // pred_check_branch
          %223 = sbr.rel (%p221) target = $region32
        $region31: #{tpu_custom_call.1} parent=11 // pred_region
          _
        $region32: #{tpu_custom_call.1} parent=11 // pred_fallthru
          _
      $region12: #{tpu_custom_call.1} parent=5 // pred_fallthru
        _
      %p224 = scmp.lt.s32.totalorder %s25, 2
      // Predicated region
      $region33: #{tpu_custom_call.1} parent=5 // pred_check
        %p225 = pneg %p224
      $region34: #{tpu_custom_call.1} parent=5 // pred_check_branch
        %227 = sbr.rel (%p225) target = $region36
      $region35: #{tpu_custom_call.1} parent=5 // pred_region
        _
      $region36: #{tpu_custom_call.1} parent=5 // pred_fallthru
        _
      %p228 = scmp.le.s32.totalorder 1, %s25
      %p229 = scmp.lt.s32.totalorder %s25, 3
      %p230 = pnand %p228, %p229
      %p231 = pneg %p230
      // Predicated region
      $region37: #{tpu_custom_call.1} parent=5 // pred_check
        _
      $region38: #{tpu_custom_call.1} parent=5 // pred_check_branch
        %233 = sbr.rel (%p230) target = $region40
      $region39: #{tpu_custom_call.1} parent=5 // pred_region
        %s234 = ssub.s32 %s25, 1
        // Predicated region
        $region41: #{tpu_custom_call.1} parent=39 // pred_check
          %p235 = pneg %p46
        $region42: #{tpu_custom_call.1} parent=39 // pred_check_branch
          %237 = sbr.rel (%p235) target = $region44
        $region43: #{tpu_custom_call.1} parent=39 // pred_region
          %238 = dma.done [#allocation7], 128
        $region44: #{tpu_custom_call.1} parent=39 // pred_fallthru
          _
        // Predicated region
        $region45: #{tpu_custom_call.1} parent=39 // pred_check
          %p239 = pneg %p67
        $region46: #{tpu_custom_call.1} parent=39 // pred_check_branch
          %241 = sbr.rel (%p239) target = $region48
        $region47: #{tpu_custom_call.1} parent=39 // pred_region
          %242 = dma.done [#allocation10], 512
        $region48: #{tpu_custom_call.1} parent=39 // pred_fallthru
          _
        // Predicated region
        $region49: #{tpu_custom_call.1} parent=39 // pred_check
          %p243 = pneg %p88
        $region50: #{tpu_custom_call.1} parent=39 // pred_check_branch
          %245 = sbr.rel (%p243) target = $region52
        $region51: #{tpu_custom_call.1} parent=39 // pred_region
          %246 = dma.done [#allocation10], 4096
        $region52: #{tpu_custom_call.1} parent=39 // pred_fallthru
          _
        // Predicated region
        $region53: #{tpu_custom_call.1} parent=39 // pred_check
          %p247 = pneg %p109
        $region54: #{tpu_custom_call.1} parent=39 // pred_check_branch
          %249 = sbr.rel (%p247) target = $region56
        $region55: #{tpu_custom_call.1} parent=39 // pred_region
          %250 = dma.done [#allocation13], 512
        $region56: #{tpu_custom_call.1} parent=39 // pred_fallthru
          _
        %p251 = pneg %p46
        %p252 = pneg %p43
        %p253 = pneg %p67
        %p254 = pneg %p64
        %p255 = pneg %p88
        %p256 = pneg %p85
        %p257 = pneg %p109
        %p258 = pneg %p106
        %p259 = pneg %p130
        %p260 = pneg %p127
        %p261 = pneg %p156
        %p262 = pneg %p153
        %s263 = sand.u32 %s143, 1
        %s264 = scalar_lea.sflag [#allocation8], %s263
        %s265 = sand.u32 %s143, 1
        %s266 = smul.addr %s265, 8
        %s267 = scalar_lea.vmem [#allocation14], %s266
        %v268 = vld [vmem:[#allocation12] sm:$0xff]
        %v269 = vld [vmem:[#allocation12 + $0x8] sm:$0xff]
        %v270 = vld [vmem:[#allocation12 + $0x10] sm:$0xff]
        %v271 = vld [vmem:[#allocation12 + $0x18] sm:$0xff]
        %v272 = vld [vmem:[#allocation9] sm:$0xff]
        %v273 = vld [vmem:[#allocation9 + $0x8] sm:$0xff]
        %v274 = vld [vmem:[#allocation9 + $0x10] sm:$0xff]
        %v275 = vld [vmem:[#allocation9 + $0x18] sm:$0xff]
        %s276 = smul.u32 %s30, 4
        %s277 = sld [smem:[#allocation5 + %s276]]
        %s278 = sld [smem:[#allocation4 + %s276]]
        %p279 = scmp.eq.s32.totalorder %s277, 0
        %s280 = scalar_select %p279, 0, 4294967295
        %v281 = vstv %s280
        %vm282 = vcmp.eq.s32.totalorder %v268, %v281
        %vm283 = vcmp.eq.s32.totalorder %v269, %v281
        %vm284 = vcmp.eq.s32.totalorder %v270, %v281
        %vm285 = vcmp.eq.s32.totalorder %v271, %v281
        %s286 = smul.u32 %s278, 32
        %s287 = scalar_lea.vmem [#allocation11], %s286
        %v288 = vld [vmem:[%s287] sm:$0xff]
        %v289 = vld [vmem:[%s287 + $0x8] sm:$0xff]
        %v290 = vld [vmem:[%s287 + $0x10] sm:$0xff]
        %v291 = vld [vmem:[%s287 + $0x18] sm:$0xff]
        %v292 = vsel %vm282, %v288, %v272
        %v293 = vsel %vm283, %v289, %v273
        %v294 = vsel %vm284, %v290, %v274
        %v295 = vsel %vm285, %v291, %v275
        %s296 = sshra.s32 %s276, 7
        %s297 = sand.u32 %s276, 127
        %s298 = sadd.s32 %s296, 1
        %s299 = smul.u32 %s298, 128
        %s300 = sshra.s32 %s276, 7
        %s301 = sand.u32 %s276, 127
        %s302 = sadd.s32 %s299, %s301
        %s303 = sld [smem:[#allocation5 + %s302]]
        %s304 = sld [smem:[#allocation4 + %s302]]
        %p305 = scmp.eq.s32.totalorder %s303, 0
        %s306 = scalar_select %p305, 1, 4294967295
        %v307 = vstv %s306
        %vm308 = vcmp.eq.s32.totalorder %v268, %v307
        %vm309 = vcmp.eq.s32.totalorder %v269, %v307
        %vm310 = vcmp.eq.s32.totalorder %v270, %v307
        %vm311 = vcmp.eq.s32.totalorder %v271, %v307
        %s312 = smul.u32 %s304, 32
        %s313 = scalar_lea.vmem [#allocation11], %s312
        %v314 = vld [vmem:[%s313] sm:$0xff]
        %v315 = vld [vmem:[%s313 + $0x8] sm:$0xff]
        %v316 = vld [vmem:[%s313 + $0x10] sm:$0xff]
        %v317 = vld [vmem:[%s313 + $0x18] sm:$0xff]
        %v318 = vsel %vm308, %v314, %v292
        %v319 = vsel %vm309, %v315, %v293
        %v320 = vsel %vm310, %v316, %v294
        %v321 = vsel %vm311, %v317, %v295
        %s322 = sadd.s32 %s296, 2
        %s323 = smul.u32 %s322, 128
        %s324 = sadd.s32 %s323, %s301
        %s325 = sld [smem:[#allocation5 + %s324]]
        %s326 = sld [smem:[#allocation4 + %s324]]
        %p327 = scmp.eq.s32.totalorder %s325, 0
        %s328 = scalar_select %p327, 2, 4294967295
        %v329 = vstv %s328
        %vm330 = vcmp.eq.s32.totalorder %v268, %v329
        %vm331 = vcmp.eq.s32.totalorder %v269, %v329
        %vm332 = vcmp.eq.s32.totalorder %v270, %v329
        %vm333 = vcmp.eq.s32.totalorder %v271, %v329
        %s334 = smul.u32 %s326, 32
        %s335 = scalar_lea.vmem [#allocation11], %s334
        %v336 = vld [vmem:[%s335] sm:$0xff]
        %v337 = vld [vmem:[%s335 + $0x8] sm:$0xff]
        %v338 = vld [vmem:[%s335 + $0x10] sm:$0xff]
        %v339 = vld [vmem:[%s335 + $0x18] sm:$0xff]
        %v340 = vsel %vm330, %v336, %v318
        %v341 = vsel %vm331, %v337, %v319
        %v342 = vsel %vm332, %v338, %v320
        %v343 = vsel %vm333, %v339, %v321
        %s344 = sadd.s32 %s296, 3
        %s345 = smul.u32 %s344, 128
        %s346 = sadd.s32 %s345, %s301
        %s347 = sld [smem:[#allocation5 + %s346]]
        %s348 = sld [smem:[#allocation4 + %s346]]
        %p349 = scmp.eq.s32.totalorder %s347, 0
        %s350 = scalar_select %p349, 3, 4294967295
        %v351 = vstv %s350
        %vm352 = vcmp.eq.s32.totalorder %v268, %v351
        %vm353 = vcmp.eq.s32.totalorder %v269, %v351
        %vm354 = vcmp.eq.s32.totalorder %v270, %v351
        %vm355 = vcmp.eq.s32.totalorder %v271, %v351
        %s356 = smul.u32 %s348, 32
        %s357 = scalar_lea.vmem [#allocation11], %s356
        %v358 = vld [vmem:[%s357] sm:$0xff]
        %v359 = vld [vmem:[%s357 + $0x8] sm:$0xff]
        %v360 = vld [vmem:[%s357 + $0x10] sm:$0xff]
        %v361 = vld [vmem:[%s357 + $0x18] sm:$0xff]
        %v362 = vsel %vm352, %v358, %v340
        %v363 = vsel %vm353, %v359, %v341
        %v364 = vsel %vm354, %v360, %v342
        %v365 = vsel %vm355, %v361, %v343
        %vm366 = vcmask 261120
        %367 = vst.msk [vmem:[#allocation2] sm:$0xff] %vm366, %v362
        %368 = vst.msk [vmem:[#allocation2 + $0x8] sm:$0xff] %vm366, %v363
        %369 = vst.msk [vmem:[#allocation2 + $0x10] sm:$0xff] %vm366, %v364
        %370 = vst.msk [vmem:[#allocation2 + $0x18] sm:$0xff] %vm366, %v365
        %s371 = sadd.s32 %s276, 1
        %s372 = sld [smem:[#allocation5 + %s371]]
        %s373 = sld [smem:[#allocation4 + %s371]]
        %p374 = scmp.eq.s32.totalorder %s372, 0
        %s375 = scalar_select %p374, 0, 4294967295
        %v376 = vstv %s375
        %vm377 = vcmp.eq.s32.totalorder %v268, %v376
        %vm378 = vcmp.eq.s32.totalorder %v269, %v376
        %vm379 = vcmp.eq.s32.totalorder %v270, %v376
        %vm380 = vcmp.eq.s32.totalorder %v271, %v376
        %s381 = smul.u32 %s373, 32
        %s382 = scalar_lea.vmem [#allocation11], %s381
        %v383 = vld [vmem:[%s382] sm:$0xff]
        %v384 = vld [vmem:[%s382 + $0x8] sm:$0xff]
        %v385 = vld [vmem:[%s382 + $0x10] sm:$0xff]
        %v386 = vld [vmem:[%s382 + $0x18] sm:$0xff]
        %v387 = vsel %vm377, %v383, %v272
        %v388 = vsel %vm378, %v384, %v273
        %v389 = vsel %vm379, %v385, %v274
        %v390 = vsel %vm380, %v386, %v275
        %s391 = sshra.s32 %s371, 7
        %s392 = sand.u32 %s371, 127
        %s393 = sadd.s32 %s391, 1
        %s394 = smul.u32 %s393, 128
        %s395 = sshra.s32 %s371, 7
        %s396 = sand.u32 %s371, 127
        %s397 = sadd.s32 %s394, %s396
        %s398 = sld [smem:[#allocation5 + %s397]]
        %s399 = sld [smem:[#allocation4 + %s397]]
        %p400 = scmp.eq.s32.totalorder %s398, 0
        %s401 = scalar_select %p400, 1, 4294967295
        %v402 = vstv %s401
        %vm403 = vcmp.eq.s32.totalorder %v268, %v402
        %vm404 = vcmp.eq.s32.totalorder %v269, %v402
        %vm405 = vcmp.eq.s32.totalorder %v270, %v402
        %vm406 = vcmp.eq.s32.totalorder %v271, %v402
        %s407 = smul.u32 %s399, 32
        %s408 = scalar_lea.vmem [#allocation11], %s407
        %v409 = vld [vmem:[%s408] sm:$0xff]
        %v410 = vld [vmem:[%s408 + $0x8] sm:$0xff]
        %v411 = vld [vmem:[%s408 + $0x10] sm:$0xff]
        %v412 = vld [vmem:[%s408 + $0x18] sm:$0xff]
        %v413 = vsel %vm403, %v409, %v387
        %v414 = vsel %vm404, %v410, %v388
        %v415 = vsel %vm405, %v411, %v389
        %v416 = vsel %vm406, %v412, %v390
        %s417 = sadd.s32 %s391, 2
        %s418 = smul.u32 %s417, 128
        %s419 = sadd.s32 %s418, %s396
        %s420 = sld [smem:[#allocation5 + %s419]]
        %s421 = sld [smem:[#allocation4 + %s419]]
        %p422 = scmp.eq.s32.totalorder %s420, 0
        %s423 = scalar_select %p422, 2, 4294967295
        %v424 = vstv %s423
        %vm425 = vcmp.eq.s32.totalorder %v268, %v424
        %vm426 = vcmp.eq.s32.totalorder %v269, %v424
        %vm427 = vcmp.eq.s32.totalorder %v270, %v424
        %vm428 = vcmp.eq.s32.totalorder %v271, %v424
        %s429 = smul.u32 %s421, 32
        %s430 = scalar_lea.vmem [#allocation11], %s429
        %v431 = vld [vmem:[%s430] sm:$0xff]
        %v432 = vld [vmem:[%s430 + $0x8] sm:$0xff]
        %v433 = vld [vmem:[%s430 + $0x10] sm:$0xff]
        %v434 = vld [vmem:[%s430 + $0x18] sm:$0xff]
        %v435 = vsel %vm425, %v431, %v413
        %v436 = vsel %vm426, %v432, %v414
        %v437 = vsel %vm427, %v433, %v415
        %v438 = vsel %vm428, %v434, %v416
        %s439 = sadd.s32 %s391, 3
        %s440 = smul.u32 %s439, 128
        %s441 = sadd.s32 %s440, %s396
        %s442 = sld [smem:[#allocation5 + %s441]]
        %s443 = sld [smem:[#allocation4 + %s441]]
        %p444 = scmp.eq.s32.totalorder %s442, 0
        %s445 = scalar_select %p444, 3, 4294967295
        %v446 = vstv %s445
        %vm447 = vcmp.eq.s32.totalorder %v268, %v446
        %vm448 = vcmp.eq.s32.totalorder %v269, %v446
        %vm449 = vcmp.eq.s32.totalorder %v270, %v446
        %vm450 = vcmp.eq.s32.totalorder %v271, %v446
        %s451 = smul.u32 %s443, 32
        %s452 = scalar_lea.vmem [#allocation11], %s451
        %v453 = vld [vmem:[%s452] sm:$0xff]
        %v454 = vld [vmem:[%s452 + $0x8] sm:$0xff]
        %v455 = vld [vmem:[%s452 + $0x10] sm:$0xff]
        %v456 = vld [vmem:[%s452 + $0x18] sm:$0xff]
        %v457 = vsel %vm447, %v453, %v435
        %v458 = vsel %vm448, %v454, %v436
        %v459 = vsel %vm449, %v455, %v437
        %v460 = vsel %vm450, %v456, %v438
        %465 = vrot.lane.b32.xlu0 %v457, 32
        %v466 = vpop.permute.xlu0 %465
        %467 = vrot.lane.b32.xlu0 %v458, 32
        %v468 = vpop.permute.xlu0 %467
        %469 = vrot.lane.b32.xlu0 %v459, 32
        %v470 = vpop.permute.xlu0 %469
        %471 = vrot.lane.b32.xlu0 %v460, 32
        %v472 = vpop.permute.xlu0 %471
        %vm477 = vcmask 523520
        %478 = vst.msk [vmem:[#allocation2] sm:$0xff] %vm477, %v466
        %479 = vst.msk [vmem:[#allocation2 + $0x8] sm:$0xff] %vm477, %v468
        %480 = vst.msk [vmem:[#allocation2 + $0x10] sm:$0xff] %vm477, %v470
        %481 = vst.msk [vmem:[#allocation2 + $0x18] sm:$0xff] %vm477, %v472
        %s482 = sadd.s32 %s276, 2
        %s483 = sld [smem:[#allocation5 + %s482]]
        %s484 = sld [smem:[#allocation4 + %s482]]
        %p485 = scmp.eq.s32.totalorder %s483, 0
        %s486 = scalar_select %p485, 0, 4294967295
        %v487 = vstv %s486
        %vm488 = vcmp.eq.s32.totalorder %v268, %v487
        %vm489 = vcmp.eq.s32.totalorder %v269, %v487
        %vm490 = vcmp.eq.s32.totalorder %v270, %v487
        %vm491 = vcmp.eq.s32.totalorder %v271, %v487
        %s492 = smul.u32 %s484, 32
        %s493 = scalar_lea.vmem [#allocation11], %s492
        %v494 = vld [vmem:[%s493] sm:$0xff]
        %v495 = vld [vmem:[%s493 + $0x8] sm:$0xff]
        %v496 = vld [vmem:[%s493 + $0x10] sm:$0xff]
        %v497 = vld [vmem:[%s493 + $0x18] sm:$0xff]
        %v498 = vsel %vm488, %v494, %v272
        %v499 = vsel %vm489, %v495, %v273
        %v500 = vsel %vm490, %v496, %v274
        %v501 = vsel %vm491, %v497, %v275
        %s502 = sshra.s32 %s482, 7
        %s503 = sand.u32 %s482, 127
        %s504 = sadd.s32 %s502, 1
        %s505 = smul.u32 %s504, 128
        %s506 = sshra.s32 %s482, 7
        %s507 = sand.u32 %s482, 127
        %s508 = sadd.s32 %s505, %s507
        %s509 = sld [smem:[#allocation5 + %s508]]
        %s510 = sld [smem:[#allocation4 + %s508]]
        %p511 = scmp.eq.s32.totalorder %s509, 0
        %s512 = scalar_select %p511, 1, 4294967295
        %v513 = vstv %s512
        %vm514 = vcmp.eq.s32.totalorder %v268, %v513
        %vm515 = vcmp.eq.s32.totalorder %v269, %v513
        %vm516 = vcmp.eq.s32.totalorder %v270, %v513
        %vm517 = vcmp.eq.s32.totalorder %v271, %v513
        %s518 = smul.u32 %s510, 32
        %s519 = scalar_lea.vmem [#allocation11], %s518
        %v520 = vld [vmem:[%s519] sm:$0xff]
        %v521 = vld [vmem:[%s519 + $0x8] sm:$0xff]
        %v522 = vld [vmem:[%s519 + $0x10] sm:$0xff]
        %v523 = vld [vmem:[%s519 + $0x18] sm:$0xff]
        %v524 = vsel %vm514, %v520, %v498
        %v525 = vsel %vm515, %v521, %v499
        %v526 = vsel %vm516, %v522, %v500
        %v527 = vsel %vm517, %v523, %v501
        %s528 = sadd.s32 %s502, 2
        %s529 = smul.u32 %s528, 128
        %s530 = sadd.s32 %s529, %s507
        %s531 = sld [smem:[#allocation5 + %s530]]
        %s532 = sld [smem:[#allocation4 + %s530]]
        %p533 = scmp.eq.s32.totalorder %s531, 0
        %s534 = scalar_select %p533, 2, 4294967295
        %v535 = vstv %s534
        %vm536 = vcmp.eq.s32.totalorder %v268, %v535
        %vm537 = vcmp.eq.s32.totalorder %v269, %v535
        %vm538 = vcmp.eq.s32.totalorder %v270, %v535
        %vm539 = vcmp.eq.s32.totalorder %v271, %v535
        %s540 = smul.u32 %s532, 32
        %s541 = scalar_lea.vmem [#allocation11], %s540
        %v542 = vld [vmem:[%s541] sm:$0xff]
        %v543 = vld [vmem:[%s541 + $0x8] sm:$0xff]
        %v544 = vld [vmem:[%s541 + $0x10] sm:$0xff]
        %v545 = vld [vmem:[%s541 + $0x18] sm:$0xff]
        %v546 = vsel %vm536, %v542, %v524
        %v547 = vsel %vm537, %v543, %v525
        %v548 = vsel %vm538, %v544, %v526
        %v549 = vsel %vm539, %v545, %v527
        %s550 = sadd.s32 %s502, 3
        %s551 = smul.u32 %s550, 128
        %s552 = sadd.s32 %s551, %s507
        %s553 = sld [smem:[#allocation5 + %s552]]
        %s554 = sld [smem:[#allocation4 + %s552]]
        %p555 = scmp.eq.s32.totalorder %s553, 0
        %s556 = scalar_select %p555, 3, 4294967295
        %v557 = vstv %s556
        %vm558 = vcmp.eq.s32.totalorder %v268, %v557
        %vm559 = vcmp.eq.s32.totalorder %v269, %v557
        %vm560 = vcmp.eq.s32.totalorder %v270, %v557
        %vm561 = vcmp.eq.s32.totalorder %v271, %v557
        %s562 = smul.u32 %s554, 32
        %s563 = scalar_lea.vmem [#allocation11], %s562
        %v564 = vld [vmem:[%s563] sm:$0xff]
        %v565 = vld [vmem:[%s563 + $0x8] sm:$0xff]
        %v566 = vld [vmem:[%s563 + $0x10] sm:$0xff]
        %v567 = vld [vmem:[%s563 + $0x18] sm:$0xff]
        %v568 = vsel %vm558, %v564, %v546
        %v569 = vsel %vm559, %v565, %v547
        %v570 = vsel %vm560, %v566, %v548
        %v571 = vsel %vm561, %v567, %v549
        %576 = vrot.lane.b32.xlu0 %v568, 64
        %v577 = vpop.permute.xlu0 %576
        %578 = vrot.lane.b32.xlu0 %v569, 64
        %v579 = vpop.permute.xlu0 %578
        %580 = vrot.lane.b32.xlu0 %v570, 64
        %v581 = vpop.permute.xlu0 %580
        %582 = vrot.lane.b32.xlu0 %v571, 64
        %v583 = vpop.permute.xlu0 %582
        %vm588 = vcmask 785920
        %589 = vst.msk [vmem:[#allocation2] sm:$0xff] %vm588, %v577
        %590 = vst.msk [vmem:[#allocation2 + $0x8] sm:$0xff] %vm588, %v579
        %591 = vst.msk [vmem:[#allocation2 + $0x10] sm:$0xff] %vm588, %v581
        %592 = vst.msk [vmem:[#allocation2 + $0x18] sm:$0xff] %vm588, %v583
        %s593 = sadd.s32 %s276, 3
        %s594 = sld [smem:[#allocation5 + %s593]]
        %s595 = sld [smem:[#allocation4 + %s593]]
        %p596 = scmp.eq.s32.totalorder %s594, 0
        %s597 = scalar_select %p596, 0, 4294967295
        %v598 = vstv %s597
        %vm599 = vcmp.eq.s32.totalorder %v268, %v598
        %vm600 = vcmp.eq.s32.totalorder %v269, %v598
        %vm601 = vcmp.eq.s32.totalorder %v270, %v598
        %vm602 = vcmp.eq.s32.totalorder %v271, %v598
        %s603 = smul.u32 %s595, 32
        %s604 = scalar_lea.vmem [#allocation11], %s603
        %v605 = vld [vmem:[%s604] sm:$0xff]
        %v606 = vld [vmem:[%s604 + $0x8] sm:$0xff]
        %v607 = vld [vmem:[%s604 + $0x10] sm:$0xff]
        %v608 = vld [vmem:[%s604 + $0x18] sm:$0xff]
        %v609 = vsel %vm599, %v605, %v272
        %v610 = vsel %vm600, %v606, %v273
        %v611 = vsel %vm601, %v607, %v274
        %v612 = vsel %vm602, %v608, %v275
        %s613 = sshra.s32 %s593, 7
        %s614 = sand.u32 %s593, 127
        %s615 = sadd.s32 %s613, 1
        %s616 = smul.u32 %s615, 128
        %s617 = sshra.s32 %s593, 7
        %s618 = sand.u32 %s593, 127
        %s619 = sadd.s32 %s616, %s618
        %s620 = sld [smem:[#allocation5 + %s619]]
        %s621 = sld [smem:[#allocation4 + %s619]]
        %p622 = scmp.eq.s32.totalorder %s620, 0
        %s623 = scalar_select %p622, 1, 4294967295
        %v624 = vstv %s623
        %vm625 = vcmp.eq.s32.totalorder %v268, %v624
        %vm626 = vcmp.eq.s32.totalorder %v269, %v624
        %vm627 = vcmp.eq.s32.totalorder %v270, %v624
        %vm628 = vcmp.eq.s32.totalorder %v271, %v624
        %s629 = smul.u32 %s621, 32
        %s630 = scalar_lea.vmem [#allocation11], %s629
        %v631 = vld [vmem:[%s630] sm:$0xff]
        %v632 = vld [vmem:[%s630 + $0x8] sm:$0xff]
        %v633 = vld [vmem:[%s630 + $0x10] sm:$0xff]
        %v634 = vld [vmem:[%s630 + $0x18] sm:$0xff]
        %v635 = vsel %vm625, %v631, %v609
        %v636 = vsel %vm626, %v632, %v610
        %v637 = vsel %vm627, %v633, %v611
        %v638 = vsel %vm628, %v634, %v612
        %s639 = sadd.s32 %s613, 2
        %s640 = smul.u32 %s639, 128
        %s641 = sadd.s32 %s640, %s618
        %s642 = sld [smem:[#allocation5 + %s641]]
        %s643 = sld [smem:[#allocation4 + %s641]]
        %p644 = scmp.eq.s32.totalorder %s642, 0
        %s645 = scalar_select %p644, 2, 4294967295
        %v646 = vstv %s645
        %vm647 = vcmp.eq.s32.totalorder %v268, %v646
        %vm648 = vcmp.eq.s32.totalorder %v269, %v646
        %vm649 = vcmp.eq.s32.totalorder %v270, %v646
        %vm650 = vcmp.eq.s32.totalorder %v271, %v646
        %s651 = smul.u32 %s643, 32
        %s652 = scalar_lea.vmem [#allocation11], %s651
        %v653 = vld [vmem:[%s652] sm:$0xff]
        %v654 = vld [vmem:[%s652 + $0x8] sm:$0xff]
        %v655 = vld [vmem:[%s652 + $0x10] sm:$0xff]
        %v656 = vld [vmem:[%s652 + $0x18] sm:$0xff]
        %v657 = vsel %vm647, %v653, %v635
        %v658 = vsel %vm648, %v654, %v636
        %v659 = vsel %vm649, %v655, %v637
        %v660 = vsel %vm650, %v656, %v638
        %s661 = sadd.s32 %s613, 3
        %s662 = smul.u32 %s661, 128
        %s663 = sadd.s32 %s662, %s618
        %s664 = sld [smem:[#allocation5 + %s663]]
        %s665 = sld [smem:[#allocation4 + %s663]]
        %p666 = scmp.eq.s32.totalorder %s664, 0
        %s667 = scalar_select %p666, 3, 4294967295
        %v668 = vstv %s667
        %vm669 = vcmp.eq.s32.totalorder %v268, %v668
        %vm670 = vcmp.eq.s32.totalorder %v269, %v668
        %vm671 = vcmp.eq.s32.totalorder %v270, %v668
        %vm672 = vcmp.eq.s32.totalorder %v271, %v668
        %s673 = smul.u32 %s665, 32
        %s674 = scalar_lea.vmem [#allocation11], %s673
        %v675 = vld [vmem:[%s674] sm:$0xff]
        %v676 = vld [vmem:[%s674 + $0x8] sm:$0xff]
        %v677 = vld [vmem:[%s674 + $0x10] sm:$0xff]
        %v678 = vld [vmem:[%s674 + $0x18] sm:$0xff]
        %v679 = vsel %vm669, %v675, %v657
        %v680 = vsel %vm670, %v676, %v658
        %v681 = vsel %vm671, %v677, %v659
        %v682 = vsel %vm672, %v678, %v660
        %687 = vrot.lane.b32.xlu0 %v679, 96
        %v688 = vpop.permute.xlu0 %687
        %689 = vrot.lane.b32.xlu0 %v680, 96
        %v690 = vpop.permute.xlu0 %689
        %691 = vrot.lane.b32.xlu0 %v681, 96
        %v692 = vpop.permute.xlu0 %691
        %693 = vrot.lane.b32.xlu0 %v682, 96
        %v694 = vpop.permute.xlu0 %693
        %vm699 = vcmask 1048320
        %700 = vst.msk [vmem:[#allocation2] sm:$0xff] %vm699, %v688
        %701 = vst.msk [vmem:[#allocation2 + $0x8] sm:$0xff] %vm699, %v690
        %702 = vst.msk [vmem:[#allocation2 + $0x10] sm:$0xff] %vm699, %v692
        %703 = vst.msk [vmem:[#allocation2 + $0x18] sm:$0xff] %vm699, %v694
        %v704 = vld [vmem:[#allocation6] sm:$0xff]
        %v705 = vld [vmem:[#allocation2] sm:$0xff]
        %v706 = vld [vmem:[#allocation2 + $0x8] sm:$0xff]
        %v707 = vld [vmem:[#allocation2 + $0x10] sm:$0xff]
        %v708 = vld [vmem:[#allocation2 + $0x18] sm:$0xff]
        %v709 = vld [vmem:[%s6] sm:$0x1]
        %v711 = vlaneseq
        %v712 = vshrl.u32 %v711, 7
        %v713 = vsub.s32 0, %v712
        %v714 = vrot.slane %v709, %v713
        %v717 = vsel %vm366, %v704, 0
        %719 = vmatprep.subr.mxu0 0.0
        %720 = vmatpush1.msra.mxu0 %v705
        %721 = vmatprep.subr.mxu0 0.0
        %722 = vmatpush1.msra.mxu0 %v706
        %723 = vmatprep.subr.mxu0 0.0
        %724 = vmatpush1.msra.mxu0 %v707
        %725 = vmatprep.subr.mxu0 0.0
        %726 = vmatpush1.msra.mxu0 %v708
        %727 = vmatprep.subr.mxu0 0.0
        %728 = vmatpush1.msra.mxu0 0.0
        %729 = vmatprep.subr.mxu0 0.0
        %730 = vmatpush1.msra.mxu0 0.0
        %731 = vmatprep.subr.mxu0 0.0
        %732 = vmatpush1.msra.mxu0 0.0
        %733 = vmatprep.subr.mxu0 0.0
        %734 = vmatpush1.msra.mxu0 0.0
        %735 = vmatprep.subr.mxu0 0.0
        %736 = vmatpush1.msra.mxu0 0.0
        %737 = vmatprep.subr.mxu0 0.0
        %738 = vmatpush1.msra.mxu0 0.0
        %739 = vmatprep.subr.mxu0 0.0
        %740 = vmatpush1.msra.mxu0 0.0
        %741 = vmatprep.subr.mxu0 0.0
        %742 = vmatpush1.msra.mxu0 0.0
        %743 = vmatprep.subr.mxu0 0.0
        %744 = vmatpush1.msra.mxu0 0.0
        %745 = vmatprep.subr.mxu0 0.0
        %746 = vmatpush1.msra.mxu0 0.0
        %747 = vmatprep.subr.mxu0 0.0
        %748 = vmatpush1.msra.mxu0 0.0
        %749 = vmatprep.subr.mxu0 0.0
        %750 = vmatpush1.msra.mxu0 0.0
        %751 = vmatprep.subr.mxu0 0.0
        %752 = vmatpush1.msra.mxu0 0.0
        %753 = vmatprep.subr.mxu0 0.0
        %754 = vmatpush1.msra.mxu0 0.0
        %755 = vmatprep.subr.mxu0 0.0
        %756 = vmatpush1.msra.mxu0 0.0
        %757 = vmatprep.subr.mxu0 0.0
        %758 = vmatpush1.msra.mxu0 0.0
        %759 = vmatprep.subr.mxu0 0.0
        %760 = vmatpush1.msra.mxu0 0.0
        %761 = vmatprep.subr.mxu0 0.0
        %762 = vmatpush1.msra.mxu0 0.0
        %763 = vmatprep.subr.mxu0 0.0
        %764 = vmatpush1.msra.mxu0 0.0
        %765 = vmatprep.subr.mxu0 0.0
        %766 = vmatpush1.msra.mxu0 0.0
        %767 = vmatprep.subr.mxu0 0.0
        %768 = vmatpush1.msra.mxu0 0.0
        %769 = vmatprep.subr.mxu0 0.0
        %770 = vmatpush1.msra.mxu0 0.0
        %771 = vmatprep.subr.mxu0 0.0
        %772 = vmatpush1.msra.mxu0 0.0
        %773 = vmatprep.subr.mxu0 0.0
        %774 = vmatpush1.msra.mxu0 0.0
        %775 = vmatprep.subr.mxu0 0.0
        %776 = vmatpush1.msra.mxu0 0.0
        %777 = vmatprep.subr.mxu0 0.0
        %778 = vmatpush1.msra.mxu0 0.0
        %779 = vmatprep.subr.mxu0 0.0
        %780 = vmatpush1.msra.mxu0 0.0
        %781 = vmatprep.subr.mxu0 0.0
        %782 = vmatpush1.msra.mxu0 0.0
        %783 = vmatprep.mubr.f32.mxu0 0.0
        %784 = vmatmul.mubr.f32.gmra.mrb[0].mxu0 %v717
        %v785 = vpop.f32.mrb[0].mxu0
        %v786 = vadd.f32 %v714, %v785
        %v787 = vpop.f32.mrb[0].mxu0
        %788 = vdwg.mxu0
        %789 = vst [vmem:[%s267] sm:$0xff] %v786
        %s790 = sand.u32 %s143, 1
        %s791 = scalar_lea.sflag [#allocation8], %s790
        %s792 = sand.u32 %s143, 1
        %s793 = smul.addr %s792, 8
        %s794 = scalar_lea.vmem [#allocation14], %s793
        // Predicated region
        $region57: #{tpu_custom_call.1} parent=39 // pred_check
          %p795 = pneg %p153
        $region58: #{tpu_custom_call.1} parent=39 // pred_check_branch
          %797 = sbr.rel (%p795) target = $region60
        $region59: #{tpu_custom_call.1} parent=39 // pred_region
          %s799 = ssub.s32 128, 128
          %800 = vsyncadd %s791, %s799
          %s801 = smul.addr %s30, 128
          %s802 = scalar_lea.hbm %s7, %s801
          %s804 = sshll.u32 %s794, 4
          %s805 = int_to_ptr.vmem [resolvable:$true] %s804
          %807 = dma.vmem_to_hbm [thread:$0]  %s805, 128, %s802, %s791
        $region60: #{tpu_custom_call.1} parent=39 // pred_fallthru
          _
      $region40: #{tpu_custom_call.1} parent=5 // pred_fallthru
        _
      %p808 = scmp.le.s32.totalorder 2, %s25
      // Predicated region
      $region61: #{tpu_custom_call.1} parent=5 // pred_check
        %p809 = pneg %p808
      $region62: #{tpu_custom_call.1} parent=5 // pred_check_branch
        %811 = sbr.rel (%p809) target = $region64
      $region63: #{tpu_custom_call.1} parent=5 // pred_region
        %s812 = ssub.s32 %s25, 2
        // Predicated region
        $region65: #{tpu_custom_call.1} parent=63 // pred_check
          %p813 = pneg %p159
        $region66: #{tpu_custom_call.1} parent=63 // pred_check_branch
          %815 = sbr.rel (%p813) target = $region68
        $region67: #{tpu_custom_call.1} parent=63 // pred_region
          %s816 = sand.u32 %s144, 1
          %s817 = scalar_lea.sflag [#allocation8], %s816
          %s818 = sand.u32 %s144, 1
          %s819 = smul.addr %s818, 8
          %s820 = scalar_lea.vmem [#allocation14], %s819
          %821 = dma.done %s817, 128
        $region68: #{tpu_custom_call.1} parent=63 // pred_fallthru
          _
      $region64: #{tpu_custom_call.1} parent=5 // pred_fallthru
        _
    $region6: #{tpu_custom_call.1} parent=1 // loop_footer
      %s29 = sadd.s32 1, %s25
    $region7: #{tpu_custom_call.1} parent=1 // loop_footer_branch
      %24 = sbr.rel target = $region3
    $region8: #{tpu_custom_call.1} parent=1 // loop_exit
      _
    %822 = vsyncpa [#allocation7], 1
    %s823 = scalar_lea.sflag [#allocation7], 1
    %824 = vsyncpa %s823, 1
    %825 = vsyncpa [#allocation10], 1
    %826 = vsyncpa [#allocation13], 1
    %827 = vsyncpa [#allocation8], 1
    %s828 = scalar_lea.sflag [#allocation8], 1
    %829 = vsyncpa %s828, 1

</llo_original>
